<compile_context>
chip_gen: v7x
topology: tpu7x:2x2x1
jax: 0.10.0
libtpu: 0.0.40
codegen_flags: <defaults>
</compile_context>

<pallas_src>
import functools

import numpy as np
import jax
import jax.numpy as jnp
from jax import lax
from jax.experimental import pallas as pl
from jax.experimental.pallas import tpu as pltpu

_LANE = 128
_FC_RESIDENT_BUDGET = 8 * 1024 * 1024   # bf16 contrast features kept resident in VMEM
_LABEL_RESIDENT_MAX_N = 4096            # (n_pad,1) f32 column lane-pads to 512 B/row
_ST_CACHE_BUDGET = 8 * 1024 * 1024      # expw pass-1 score cache (n_pad x TQ f32)
_VMEM_LIMIT = 48 * 1024 * 1024          # safe on v5e/v6e (128 MiB) and v7x (64 MiB)


def _round_up(x, m):
    return ((x + m - 1) // m) * m


def _pick_tiles(n):
    """Anchor tile TQ, contrast tile TK, padded N (multiple of both)."""
    n128 = _round_up(max(n, 1), _LANE)
    if n128 >= 1024:
        tq = 512          # >=2 row tiles -> both v7x TensorCores stay busy
    elif n128 >= 512:
        tq = 256
    else:
        tq = 128
    tk = 256 if n128 >= 256 else 128
    n_pad = _round_up(n, max(tq, tk))
    return tq, tk, n_pad


def _tile_masks(i, col0, tk, tq, n_valid):
    """Padded-column mask [tk,1] and keep (valid & off-diagonal) mask [tk,tq]."""
    k_iota = col0 + lax.broadcasted_iota(jnp.int32, (tk, 1), 0)      # contrast ids
    q_iota = i * tq + lax.broadcasted_iota(jnp.int32, (1, tq), 1)    # anchor ids
    cvalid = k_iota < n_valid
    keep = jnp.logical_and(cvalid, k_iota != q_iota)
    return cvalid, keep


# ---------------------------------------------------------------------------
# method='supcon': single-pass online softmax
# ---------------------------------------------------------------------------
def _supcon_online_kernel(lab_r_ref, lab_c_ref, fr_ref, fc_ref, out_ref,
                          m_scr, e_scr, a_scr, p_scr, *,
                          n_valid, tk, fc_resident, lab_resident,
                          loss_scale, pairwise_fn):
    i = pl.program_id(0)
    k = pl.program_id(1)
    tq = fr_ref.shape[0]
    col0 = pl.multiple_of(k * tk, tk)

    @pl.when(k == 0)
    def _():
        m_scr[...] = jnp.full(m_scr.shape, -jnp.inf, jnp.float32)
        e_scr[...] = jnp.zeros(e_scr.shape, jnp.float32)
        a_scr[...] = jnp.zeros(a_scr.shape, jnp.float32)
        p_scr[...] = jnp.zeros(p_scr.shape, jnp.float32)

    fcol = fc_ref[pl.ds(col0, tk), :] if fc_resident else fc_ref[...]
    lcol = lab_c_ref[pl.ds(col0, tk), :] if lab_resident else lab_c_ref[...]

    # S^T tile [tk, tq]: contract the feature dims directly (no transpose), so
    # per-anchor reductions land lane-dense in [1, tq].
    s_t = lax.dot_general(fcol, fr_ref[...],
                          dimension_numbers=(((1,), (1,)), ((), ())),
                          preferred_element_type=jnp.float32)

    cvalid, keep = _tile_masks(i, col0, tk, tq, n_valid)

    # Online softmax.  Max is over all valid columns (diagonal included),
    # matching torch.max(anchor_dot_contrast, dim=1).
    m_prev = m_scr[...]
    m_new = jnp.maximum(m_prev,
                        jnp.max(jnp.where(cvalid, s_t, -jnp.inf),
                                axis=0, keepdims=True))
    alpha = jnp.exp(m_prev - m_new)

    mask_t = pairwise_fn(lab_r_ref[...], lcol).astype(jnp.float32)
    pos = jnp.where(keep, mask_t, 0.0)
    u = jnp.where(keep, jnp.exp(s_t - m_new), 0.0)

    e_scr[...] = alpha * e_scr[...] + jnp.sum(u, axis=0, keepdims=True)
    a_scr[...] += jnp.sum(pos * s_t, axis=0, keepdims=True)
    p_scr[...] += jnp.sum(pos, axis=0, keepdims=True)
    m_scr[...] = m_new

    @pl.when(k == pl.num_programs(1) - 1)
    def _():
        # sum(pos*(logits - U)) / sum(pos) == A/P - m - log(E)
        log_prob = a_scr[...] / p_scr[...] - m_scr[...] - jnp.log(e_scr[...])
        out_ref[...] = (-loss_scale) * log_prob


# ---------------------------------------------------------------------------
# method='expw': exact two passes with a VMEM score cache
# ---------------------------------------------------------------------------
def _expw_twopass_kernel(lab_r_ref, lab_c_ref, fr_ref, fc_ref, out_ref, *scratch,
                         n_valid, tk, nk, fc_resident, lab_resident, use_cache,
                         loss_scale, pairwise_fn):
    m_scr, e_scr, a_scr, p_scr = scratch[:4]
    st_cache = scratch[4] if use_cache else None

    i = pl.program_id(0)
    k = pl.program_id(1)
    kc = k % nk
    tq = fr_ref.shape[0]
    col0 = pl.multiple_of(kc * tk, tk)

    lcol = lab_c_ref[pl.ds(col0, tk), :] if lab_resident else lab_c_ref[...]
    cvalid, keep = _tile_masks(i, col0, tk, tq, n_valid)

    def compute_s_t():
        fcol = fc_ref[pl.ds(col0, tk), :] if fc_resident else fc_ref[...]
        return lax.dot_general(fcol, fr_ref[...],
                               dimension_numbers=(((1,), (1,)), ((), ())),
                               preferred_element_type=jnp.float32)

    @pl.when(k == 0)
    def _():
        m_scr[...] = jnp.full(m_scr.shape, -jnp.inf, jnp.float32)

    # ---- pass 1: exact per-anchor row max; cache the score strip ----
    @pl.when(k < nk)
    def _():
        s_t = compute_s_t()
        if use_cache:
            st_cache[pl.ds(col0, tk), :] = s_t
        m_scr[...] = jnp.maximum(
            m_scr[...],
            jnp.max(jnp.where(cvalid, s_t, -jnp.inf), axis=0, keepdims=True))

    @pl.when(k == nk)
    def _():
        e_scr[...] = jnp.zeros(e_scr.shape, jnp.float32)
        a_scr[...] = jnp.zeros(a_scr.shape, jnp.float32)
        p_scr[...] = jnp.zeros(p_scr.shape, jnp.float32)

    # ---- pass 2: masked exponential / positive-pair accumulators ----
    @pl.when(k >= nk)
    def _():
        if use_cache:
            s_t = st_cache[pl.ds(col0, tk), :]      # no matmul, no fc DMA
        else:
            s_t = compute_s_t()
        logits = s_t - m_scr[...]
        mask_t = pairwise_fn(lab_r_ref[...], lcol).astype(jnp.float32)
        pos = jnp.where(keep, mask_t, 0.0)
        u = jnp.where(keep, jnp.exp(logits * (1.0 - mask_t)), 0.0)
        e_scr[...] += jnp.sum(u, axis=0, keepdims=True)
        a_scr[...] += jnp.sum(pos * s_t, axis=0, keepdims=True)
        p_scr[...] += jnp.sum(pos, axis=0, keepdims=True)

    @pl.when(k == 2 * nk - 1)
    def _():
        log_prob = a_scr[...] / p_scr[...] - m_scr[...] - jnp.log(e_scr[...])
        out_ref[...] = (-loss_scale) * log_prob


# ---------------------------------------------------------------------------
# Wrapper (view flattening, label flattening, padding, tile policy, final mean)
# ---------------------------------------------------------------------------
def kernelized_supcon_loss(features, labels=None, *, temperature=0.07,
                           base_temperature=0.07, method="supcon",
                           label_pair_kernel=None, delta_reduction="sum"):
    """features: [bsz, n_views, n_feats]; labels: [bsz] or None. Returns scalar.
    Implements contrast_mode='all'.  `label_pair_kernel(a, b)` is an elementwise
    pairwise label kernel (e.g. RBF); label equality is used when it is None."""
    if label_pair_kernel is not None and method == "supcon":
        raise ValueError("Kernel must be none if method=supcon")
    if label_pair_kernel is None and method != "supcon":
        raise ValueError("Kernel must not be none if method != supcon")
    if delta_reduction not in ("mean", "sum"):
        raise ValueError(f"Invalid reduction {delta_reduction}")
    if method == "threshold":
        # TODO(synk): method == 'threshold' needs an N x N x N delta tensor; not implemented.
        raise NotImplementedError("method='threshold' is not implemented")
    if features.ndim != 3:
        raise ValueError("`features` needs to be [bsz, n_views, n_feats]")

    bsz, n_views, d = features.shape
    if labels is not None and labels.reshape(-1).shape[0] != bsz:
        raise ValueError("Num of labels does not match num of features")

    n = bsz * n_views
    tq, tk, n_pad = _pick_tiles(n)
    nk = n_pad // tk
    n_rows = n_pad // tq
    d_pad = _round_up(d, _LANE)

    # torch.cat(torch.unbind(features, dim=1), dim=0); fold 1/T as 1/sqrt(T) on
    # both Gram operands; bf16 into the MXU with f32 accumulation.
    feat = jnp.transpose(features, (1, 0, 2)).reshape(n, d).astype(jnp.float32)
    feat = feat * (1.0 / np.sqrt(temperature))
    feat = jnp.pad(feat, ((0, n_pad - n), (0, d_pad - d))).astype(jnp.bfloat16)

    # O(N) flattened labels instead of an O(N^2) mask through HBM.
    if labels is None:
        base = jnp.arange(bsz, dtype=jnp.float32)      # eye(bsz) == id equality
    else:
        base = labels.reshape(-1).astype(jnp.float32)
    lab = jnp.pad(jnp.tile(base, n_views), (0, n_pad - n), constant_values=-1.0)
    lab_row = lab.reshape(1, n_pad)
    lab_col = lab.reshape(n_pad, 1)

    pairwise = (lambda a, b: a == b) if label_pair_kernel is None else label_pair_kernel
    loss_scale = float(temperature / base_temperature)

    fc_resident = (n_pad * d_pad * 2) <= _FC_RESIDENT_BUDGET
    lab_resident = n_pad <= _LABEL_RESIDENT_MAX_N

    lab_r_spec = pl.BlockSpec((1, tq), lambda i, k: (0, i))      # re-fetched per row tile only
    fr_spec = pl.BlockSpec((tq, d_pad), lambda i, k: (i, 0))     # re-fetched per row tile only
    out_spec = pl.BlockSpec((1, tq), lambda i, k: (0, i))
    lab_c_spec = (pl.BlockSpec((n_pad, 1), lambda i, k: (0, 0))  # single DMA, resident
                  if lab_resident else None)
    acc_scratch = [pltpu.VMEM((1, tq), jnp.float32)] * 4         # m, e, a, p

    if method == "supcon":
        grid = (n_rows, nk)
        matmul_sweeps, fc_sweeps = 1, (1 if fc_resident else n_rows)
        if fc_resident:
            fc_spec = pl.BlockSpec((n_pad, d_pad), lambda i, k: (0, 0))
        else:
            fc_spec = pl.BlockSpec((tk, d_pad), lambda i, k: (k, 0))
        if not lab_resident:
            lab_c_spec = pl.BlockSpec((tk, 1), lambda i, k: (k, 0))
        kern = functools.partial(
            _supcon_online_kernel, n_valid=n, tk=tk, fc_resident=fc_resident,
            lab_resident=lab_resident, loss_scale=loss_scale, pairwise_fn=pairwise)
        scratch_shapes = list(acc_scratch)
    else:  # expw
        grid = (n_rows, 2 * nk)
        use_cache = (n_pad * tq * 4) <= _ST_CACHE_BUDGET
        matmul_sweeps = 1 if use_cache else 2
        fc_sweeps = 1 if fc_resident else (n_rows * matmul_sweeps)
        if fc_resident:
            fc_spec = pl.BlockSpec((n_pad, d_pad), lambda i, k: (0, 0))
        elif use_cache:
            # clamp during pass 2: block index stays constant -> no re-DMA
            fc_spec = pl.BlockSpec((tk, d_pad), lambda i, k: (jnp.minimum(k, nk - 1), 0))
        else:
            fc_spec = pl.BlockSpec((tk, d_pad), lambda i, k: (k % nk, 0))
        if not lab_resident:
            lab_c_spec = pl.BlockSpec((tk, 1), lambda i, k: (k % nk, 0))
        kern = functools.partial(
            _expw_twopass_kernel, n_valid=n, tk=tk, nk=nk, fc_resident=fc_resident,
            lab_resident=lab_resident, use_cache=use_cache,
            loss_scale=loss_scale, pairwise_fn=pairwise)
        scratch_shapes = list(acc_scratch)
        if use_cache:
            scratch_shapes.append(pltpu.VMEM((n_pad, tq), jnp.float32))

    cost = pl.CostEstimate(
        flops=int(2 * matmul_sweeps * n_pad * n_pad * d_pad),
        transcendentals=int(n_pad * n_pad),
        bytes_accessed=int((fc_sweeps + 1) * n_pad * d_pad * 2 + 3 * n_pad * 4))

    per_anchor = pl.pallas_call(
        kern,
        out_shape=jax.ShapeDtypeStruct((1, n_pad), jnp.float32),
        grid_spec=pltpu.PrefetchScalarGridSpec(
            num_scalar_prefetch=0,
            grid=grid,
            in_specs=[lab_r_spec, lab_c_spec, fr_spec, fc_spec],
            out_specs=out_spec,
            scratch_shapes=scratch_shapes),
        compiler_params=pltpu.CompilerParams(
            dimension_semantics=("parallel", "arbitrary"),
            vmem_limit_bytes=_VMEM_LIMIT),
        cost_estimate=cost,
    )(lab_row, lab_col, feat, feat)

    # Padded anchors (and anchors with zero positive pairs, as in the PyTorch
    # reference) are NaN; padded ones are sliced off before the mean.
    return jnp.mean(per_anchor[0, :n])


# ---------------------------------------------------------------------------
# Pure-JAX reference (direct f32 port of the PyTorch forward), for verification
# ---------------------------------------------------------------------------
def reference_loss(features, labels=None, *, temperature=0.07,
                   base_temperature=0.07, method="supcon", label_pair_kernel=None):
    bsz, n_views, d = features.shape
    n = bsz * n_views
    if labels is None:
        base = jnp.arange(bsz, dtype=jnp.float32)
    else:
        base = labels.reshape(-1).astype(jnp.float32)
    if label_pair_kernel is None:
        base_mask = (base[:, None] == base[None, :]).astype(jnp.float32)
    else:
        base_mask = label_pair_kernel(base[:, None], base[None, :]).astype(jnp.float32)
    mask = jnp.tile(base_mask, (n_views, n_views))
    feat = jnp.transpose(features, (1, 0, 2)).reshape(n, d).astype(jnp.float32)
    inv_diag = 1.0 - jnp.eye(n, dtype=jnp.float32)
    adc = (feat @ feat.T) / temperature
    logits = adc - jnp.max(adc, axis=1, keepdims=True)
    alignment = logits
    if method == "expw":
        uniformity = jnp.exp(logits * (1.0 - mask)) * inv_diag
    else:
        uniformity = jnp.exp(logits) * inv_diag
    uniformity = jnp.log(jnp.sum(uniformity, axis=1, keepdims=True))
    positive_mask = mask * inv_diag
    log_prob = alignment - uniformity
    log_prob = jnp.sum(positive_mask * log_prob, axis=1) / jnp.sum(positive_mask, axis=1)
    return jnp.mean(-(temperature / base_temperature) * log_prob)


if __name__ == "__main__":
    key = jax.random.PRNGKey(0)
    kf, kl, kf2, kl2 = jax.random.split(key, 4)

    rbf = lambda a, b: jnp.exp(-((a - b) ** 2) / 2.0)

    def check(feats, labs, method, kernel_fn=None):
        got = jax.block_until_ready(
            kernelized_supcon_loss(feats, labs, method=method, label_pair_kernel=kernel_fn))
        want = jax.block_until_ready(
            reference_loss(feats, labs, method=method, label_pair_kernel=kernel_fn))
        assert np.allclose(np.asarray(got), np.asarray(want), rtol=5e-2, atol=5e-2), \
            (method, got, want)

    # --- small case: single tile, row/col padding (n=16, n_pad=128) ---
    bsz, n_views, n_feats = 8, 2, 32
    f1 = jax.random.normal(kf, (bsz, n_views, n_feats), dtype=jnp.float32)
    f1 = f1 / jnp.linalg.norm(f1, axis=-1, keepdims=True)
    l1 = jax.random.randint(kl, (bsz,), 0, 4)
    check(f1, l1, "supcon")
    check(f1, None, "supcon")                 # SimCLR path (labels=None)
    check(f1, l1, "expw", rbf)                # expw with an RBF pairwise label kernel

    # --- multi-tile case: 2 row tiles x 2 col tiles (n=400, n_pad=512) ---
    # exercises online softmax across column tiles, diagonal-overlap handling
    # and last-tile padding for both methods.
    bsz2, n_views2, n_feats2 = 200, 2, 64
    f2 = jax.random.normal(kf2, (bsz2, n_views2, n_feats2), dtype=jnp.float32)
    f2 = f2 / jnp.linalg.norm(f2, axis=-1, keepdims=True)
    l2 = jax.random.randint(kl2, (bsz2,), 0, 6)
    check(f2, l2, "supcon")
    check(f2, l2, "expw", rbf)

    print("KERNEL_OK")
</pallas_src>

<mosaic_0001>
module attributes {stable_mosaic.version = 11 : i64} {
  func.func @_supcon_online_kernel(%arg0: i32, %arg1: i32, %arg2: memref<1x128xf32, #tpu.memory_space<vmem>>, %arg3: memref<128x1xf32, #tpu.memory_space<vmem>>, %arg4: memref<128x128xbf16, #tpu.memory_space<vmem>>, %arg5: memref<128x128xbf16, #tpu.memory_space<vmem>>, %arg6: memref<1x128xf32, #tpu.memory_space<vmem>>, %arg7: memref<1x128xf32, #tpu.memory_space<vmem>>, %arg8: memref<1x128xf32, #tpu.memory_space<vmem>>, %arg9: memref<1x128xf32, #tpu.memory_space<vmem>>, %arg10: memref<1x128xf32, #tpu.memory_space<vmem>>) attributes {dimension_semantics = [#tpu.dimension_semantics<parallel>, #tpu.dimension_semantics<arbitrary>], iteration_bounds = array<i64: 1, 1>, scalar_prefetch = 0 : i64, scratch_operands = 4 : i64, tpu.core_type = #tpu.core_type<tc>, window_params = [{transform_indices = @transform_0, window_bounds = array<i64: 1, 128>}, {pipeline_mode = #tpu.pipeline_mode<synchronous>, transform_indices = @transform_1, window_bounds = array<i64: 128, 1>}, {transform_indices = @transform_2, window_bounds = array<i64: 128, 128>}, {pipeline_mode = #tpu.pipeline_mode<synchronous>, transform_indices = @transform_3, window_bounds = array<i64: 128, 128>}, {transform_indices = @transform_4, window_bounds = array<i64: 1, 128>}]} {
    %c128_i32 = arith.constant 128 : i32
    %0 = arith.muli %arg1, %c128_i32 : i32
    %1 = tpu.assume_multiple %0, 128 : i32
    %c0_i32 = arith.constant 0 : i32
    %2 = arith.cmpi eq, %arg1, %c0_i32 : i32
    %3 = arith.extui %2 : i1 to i32
    %c0_i32_0 = arith.constant 0 : i32
    %4 = arith.cmpi ne, %3, %c0_i32_0 : i32
    scf.if %4 {
      %cst_32 = arith.constant 0xFF800000 : f32
      %69 = vector.broadcast %cst_32 : f32 to vector<1x128xf32>
      %c0_33 = arith.constant 0 : index
      %c0_34 = arith.constant 0 : index
      %70 = vector.load %arg7[%c0_33, %c0_34] : memref<1x128xf32, #tpu.memory_space<vmem>>, vector<1x128xf32>
      tpu.vector_store %arg7[%c0_33, %c0_34], %69 {strides = array<i32>} : memref<1x128xf32, #tpu.memory_space<vmem>>, vector<1x128xf32>,
      %cst_35 = arith.constant 0.000000e+00 : f32
      %71 = vector.broadcast %cst_35 : f32 to vector<1x128xf32>
      %c0_36 = arith.constant 0 : index
      %c0_37 = arith.constant 0 : index
      %72 = vector.load %arg8[%c0_36, %c0_37] : memref<1x128xf32, #tpu.memory_space<vmem>>, vector<1x128xf32>
      tpu.vector_store %arg8[%c0_36, %c0_37], %71 {strides = array<i32>} : memref<1x128xf32, #tpu.memory_space<vmem>>, vector<1x128xf32>,
      %cst_38 = arith.constant 0.000000e+00 : f32
      %73 = vector.broadcast %cst_38 : f32 to vector<1x128xf32>
      %c0_39 = arith.constant 0 : index
      %c0_40 = arith.constant 0 : index
      %74 = vector.load %arg9[%c0_39, %c0_40] : memref<1x128xf32, #tpu.memory_space<vmem>>, vector<1x128xf32>
      tpu.vector_store %arg9[%c0_39, %c0_40], %73 {strides = array<i32>} : memref<1x128xf32, #tpu.memory_space<vmem>>, vector<1x128xf32>,
      %cst_41 = arith.constant 0.000000e+00 : f32
      %75 = vector.broadcast %cst_41 : f32 to vector<1x128xf32>
      %c0_42 = arith.constant 0 : index
      %c0_43 = arith.constant 0 : index
      %76 = vector.load %arg10[%c0_42, %c0_43] : memref<1x128xf32, #tpu.memory_space<vmem>>, vector<1x128xf32>
      tpu.vector_store %arg10[%c0_42, %c0_43], %75 {strides = array<i32>} : memref<1x128xf32, #tpu.memory_space<vmem>>, vector<1x128xf32>,
    } else {
    }
    %5 = arith.index_cast %1 : i32 to index
    %c0 = arith.constant 0 : index
    %6 = vector.load %arg5[%5, %c0] : memref<128x128xbf16, #tpu.memory_space<vmem>>, vector<128x128xbf16>
    %7 = arith.index_cast %1 : i32 to index
    %c0_1 = arith.constant 0 : index
    %8 = vector.load %arg3[%7, %c0_1] : memref<128x1xf32, #tpu.memory_space<vmem>>, vector<128x1xf32>
    %c0_2 = arith.constant 0 : index
    %c0_3 = arith.constant 0 : index
    %9 = vector.load %arg4[%c0_2, %c0_3] : memref<128x128xbf16, #tpu.memory_space<vmem>>, vector<128x128xbf16>
    %cst = arith.constant dense<0.000000e+00> : vector<128x128xf32>
    %10 = tpu.matmul %6, %9, %cst {dimension_numbers = #tpu.dot_dimension_numbers<[1], [1], [0], [0], [0, 0, 1, 0], [], []>} : vector<128x128xbf16>, vector<128x128xbf16>, vector<128x128xf32> -> vector<128x128xf32>
    %11 = tpu.iota {dimensions = array<i32: 0>} : vector<128x1xi32>
    %12 = vector.broadcast %1 : i32 to vector<128x1xi32>
    %13 = arith.addi %12, %11 : vector<128x1xi32>
    %c128_i32_4 = arith.constant 128 : i32
    %14 = arith.muli %arg0, %c128_i32_4 : i32
    %15 = tpu.iota {dimensions = array<i32: 1>} : vector<1x128xi32>
    %16 = vector.broadcast %14 : i32 to vector<1x128xi32>
    %17 = arith.addi %16, %15 : vector<1x128xi32>
    %c16_i32 = arith.constant 16 : i32
    %18 = vector.broadcast %c16_i32 : i32 to vector<128x1xi32>
    %19 = arith.cmpi slt, %13, %18 : vector<128x1xi32>
    %20 = vector.broadcast %13 : vector<128x1xi32> to vector<128x128xi32>
    %21 = vector.broadcast %17 : vector<1x128xi32> to vector<128x128xi32>
    %22 = arith.cmpi ne, %20, %21 : vector<128x128xi32>
    %23 = vector.broadcast %19 : vector<128x1xi1> to vector<128x128xi1>
    %24 = arith.andi %23, %22 : vector<128x128xi1>
    %c0_5 = arith.constant 0 : index
    %c0_6 = arith.constant 0 : index
    %25 = vector.load %arg7[%c0_5, %c0_6] : memref<1x128xf32, #tpu.memory_space<vmem>>, vector<1x128xf32>
    %cst_7 = arith.constant 0xFF800000 : f32
    %26 = vector.shape_cast %19 : vector<128x1xi1> to vector<128x1xi1>
    %27 = vector.broadcast %26 : vector<128x1xi1> to vector<128x128xi1>
    %28 = vector.broadcast %cst_7 : f32 to vector<128x128xf32>
    %29 = arith.select %27, %10, %28 : vector<128x128xi1>, vector<128x128xf32>
    %cst_8 = arith.constant dense<0xFF800000> : vector<128xf32>
    %30 = vector.multi_reduction <maximumf>, %29, %cst_8 [0] : vector<128x128xf32> to vector<128xf32>
    %31 = vector.shape_cast %30 : vector<128xf32> to vector<1x128xf32>
    %32 = arith.maximumf %25, %31 : vector<1x128xf32>
    %33 = arith.subf %25, %32 : vector<1x128xf32>
    %34 = math.exp %33 : vector<1x128xf32>
    %c0_9 = arith.constant 0 : index
    %c0_10 = arith.constant 0 : index
    %35 = vector.load %arg2[%c0_9, %c0_10] : memref<1x128xf32, #tpu.memory_space<vmem>>, vector<1x128xf32>
    %36 = vector.broadcast %35 : vector<1x128xf32> to vector<128x128xf32>
    %37 = vector.broadcast %8 : vector<128x1xf32> to vector<128x128xf32>
    %38 = arith.cmpf oeq, %36, %37 : vector<128x128xf32>
    %39 = arith.extui %38 : vector<128x128xi1> to vector<128x128xi32>
    %40 = arith.sitofp %39 : vector<128x128xi32> to vector<128x128xf32>
    %cst_11 = arith.constant 0.000000e+00 : f32
    %41 = vector.broadcast %cst_11 : f32 to vector<128x128xf32>
    %42 = arith.select %24, %40, %41 : vector<128x128xi1>, vector<128x128xf32>
    %43 = vector.broadcast %32 : vector<1x128xf32> to vector<128x128xf32>
    %44 = arith.subf %10, %43 : vector<128x128xf32>
    %45 = math.exp %44 : vector<128x128xf32>
    %cst_12 = arith.constant 0.000000e+00 : f32
    %46 = vector.broadcast %cst_12 : f32 to vector<128x128xf32>
    %47 = arith.select %24, %45, %46 : vector<128x128xi1>, vector<128x128xf32>
    %c0_13 = arith.constant 0 : index
    %c0_14 = arith.constant 0 : index
    %48 = vector.load %arg8[%c0_13, %c0_14] : memref<1x128xf32, #tpu.memory_space<vmem>>, vector<1x128xf32>
    %49 = arith.mulf %34, %48 : vector<1x128xf32>
    %cst_15 = arith.constant dense<0.000000e+00> : vector<128xf32>
    %50 = vector.multi_reduction <add>, %47, %cst_15 [0] : vector<128x128xf32> to vector<128xf32>
    %51 = vector.shape_cast %50 : vector<128xf32> to vector<1x128xf32>
    %52 = arith.addf %49, %51 : vector<1x128xf32>
    %c0_16 = arith.constant 0 : index
    %c0_17 = arith.constant 0 : index
    %53 = vector.load %arg8[%c0_16, %c0_17] : memref<1x128xf32, #tpu.memory_space<vmem>>, vector<1x128xf32>
    tpu.vector_store %arg8[%c0_16, %c0_17], %52 {strides = array<i32>} : memref<1x128xf32, #tpu.memory_space<vmem>>, vector<1x128xf32>,
    %c0_18 = arith.constant 0 : index
    %c0_19 = arith.constant 0 : index
    %54 = vector.load %arg9[%c0_18, %c0_19] : memref<1x128xf32, #tpu.memory_space<vmem>>, vector<1x128xf32>
    %55 = arith.mulf %42, %10 : vector<128x128xf32>
    %cst_20 = arith.constant dense<0.000000e+00> : vector<128xf32>
    %56 = vector.multi_reduction <add>, %55, %cst_20 [0] : vector<128x128xf32> to vector<128xf32>
    %57 = vector.shape_cast %56 : vector<128xf32> to vector<1x128xf32>
    %58 = arith.addf %54, %57 : vector<1x128xf32>
    %c0_21 = arith.constant 0 : index
    %c0_22 = arith.constant 0 : index
    %59 = vector.load %arg9[%c0_21, %c0_22] : memref<1x128xf32, #tpu.memory_space<vmem>>, vector<1x128xf32>
    tpu.vector_store %arg9[%c0_21, %c0_22], %58 {strides = array<i32>} : memref<1x128xf32, #tpu.memory_space<vmem>>, vector<1x128xf32>,
    %c0_23 = arith.constant 0 : index
    %c0_24 = arith.constant 0 : index
    %60 = vector.load %arg10[%c0_23, %c0_24] : memref<1x128xf32, #tpu.memory_space<vmem>>, vector<1x128xf32>
    %cst_25 = arith.constant dense<0.000000e+00> : vector<128xf32>
    %61 = vector.multi_reduction <add>, %42, %cst_25 [0] : vector<128x128xf32> to vector<128xf32>
    %62 = vector.shape_cast %61 : vector<128xf32> to vector<1x128xf32>
    %63 = arith.addf %60, %62 : vector<1x128xf32>
    %c0_26 = arith.constant 0 : index
    %c0_27 = arith.constant 0 : index
    %64 = vector.load %arg10[%c0_26, %c0_27] : memref<1x128xf32, #tpu.memory_space<vmem>>, vector<1x128xf32>
    tpu.vector_store %arg10[%c0_26, %c0_27], %63 {strides = array<i32>} : memref<1x128xf32, #tpu.memory_space<vmem>>, vector<1x128xf32>,
    %c0_28 = arith.constant 0 : index
    %c0_29 = arith.constant 0 : index
    %65 = vector.load %arg7[%c0_28, %c0_29] : memref<1x128xf32, #tpu.memory_space<vmem>>, vector<1x128xf32>
    tpu.vector_store %arg7[%c0_28, %c0_29], %32 {strides = array<i32>} : memref<1x128xf32, #tpu.memory_space<vmem>>, vector<1x128xf32>,
    %c0_i32_30 = arith.constant 0 : i32
    %66 = arith.cmpi eq, %arg1, %c0_i32_30 : i32
    %67 = arith.extui %66 : i1 to i32
    %c0_i32_31 = arith.constant 0 : i32
    %68 = arith.cmpi ne, %67, %c0_i32_31 : i32
    scf.if %68 {
      %c0_32 = arith.constant 0 : index
      %c0_33 = arith.constant 0 : index
      %69 = vector.load %arg9[%c0_32, %c0_33] : memref<1x128xf32, #tpu.memory_space<vmem>>, vector<1x128xf32>
      %c0_34 = arith.constant 0 : index
      %c0_35 = arith.constant 0 : index
      %70 = vector.load %arg10[%c0_34, %c0_35] : memref<1x128xf32, #tpu.memory_space<vmem>>, vector<1x128xf32>
      %71 = arith.divf %69, %70 : vector<1x128xf32>
      %c0_36 = arith.constant 0 : index
      %c0_37 = arith.constant 0 : index
      %72 = vector.load %arg7[%c0_36, %c0_37] : memref<1x128xf32, #tpu.memory_space<vmem>>, vector<1x128xf32>
      %73 = arith.subf %71, %72 : vector<1x128xf32>
      %c0_38 = arith.constant 0 : index
      %c0_39 = arith.constant 0 : index
      %74 = vector.load %arg8[%c0_38, %c0_39] : memref<1x128xf32, #tpu.memory_space<vmem>>, vector<1x128xf32>
      %75 = math.log %74 : vector<1x128xf32>
      %76 = arith.subf %73, %75 : vector<1x128xf32>
      %cst_40 = arith.constant -1.000000e+00 : f32
      %77 = vector.broadcast %cst_40 : f32 to vector<1x128xf32>
      %78 = arith.mulf %77, %76 : vector<1x128xf32>
      %c0_41 = arith.constant 0 : index
      %c0_42 = arith.constant 0 : index
      %79 = vector.load %arg6[%c0_41, %c0_42] : memref<1x128xf32, #tpu.memory_space<vmem>>, vector<1x128xf32>
      tpu.vector_store %arg6[%c0_41, %c0_42], %78 {strides = array<i32>} : memref<1x128xf32, #tpu.memory_space<vmem>>, vector<1x128xf32>,
    } else {
    }
    return
  }
  func.func @transform_0(%arg0: i32, %arg1: i32) -> (i32, i32) {
    %c0_i32 = arith.constant 0 : i32
    %c0_i32_0 = arith.constant 0 : i32
    return %c0_i32, %arg0 : i32, i32
  }
  func.func @transform_1(%arg0: i32, %arg1: i32) -> (i32, i32) {
    %c0_i32 = arith.constant 0 : i32
    %c0_i32_0 = arith.constant 0 : i32
    %c0_i32_1 = arith.constant 0 : i32
    return %c0_i32, %c0_i32_0 : i32, i32
  }
  func.func @transform_2(%arg0: i32, %arg1: i32) -> (i32, i32) {
    %c0_i32 = arith.constant 0 : i32
    %c0_i32_0 = arith.constant 0 : i32
    return %arg0, %c0_i32 : i32, i32
  }
  func.func @transform_3(%arg0: i32, %arg1: i32) -> (i32, i32) {
    %c0_i32 = arith.constant 0 : i32
    %c0_i32_0 = arith.constant 0 : i32
    %c0_i32_1 = arith.constant 0 : i32
    return %c0_i32, %c0_i32_0 : i32, i32
  }
  func.func @transform_4(%arg0: i32, %arg1: i32) -> (i32, i32) {
    %c0_i32 = arith.constant 0 : i32
    %c0_i32_0 = arith.constant 0 : i32
    return %c0_i32, %arg0 : i32, i32
  }
}

</mosaic_0001>

<llo_original>
// kernel: tpu_custom_call.1
$region0: #{tpu_custom_call.1}
  #allocation0 [shape = 'u32[]', space=smem, size = 0x4, offset = 0x4, fixed_abs, tag = 'smem constant byte address 0x4 - core index']
  #allocation1 [shape = 'u32[144,128]{1,0:T(1,128)}', space=vmem, size = 0x12000, scoped, tag = 'internal scratch']
  #allocation2 [shape = 'f32[1,128]{1,0:T(1,128)}', space=vmem, size = 0x200, scoped, tag = 'scratch operand']
  #allocation3 [shape = 'f32[1,128]{1,0:T(1,128)}', space=vmem, size = 0x200, scoped, tag = 'scratch operand']
  #allocation4 [shape = 'f32[1,128]{1,0:T(1,128)}', space=vmem, size = 0x200, scoped, tag = 'scratch operand']
  #allocation5 [shape = 'f32[1,128]{1,0:T(1,128)}', space=vmem, size = 0x200, scoped, tag = 'scratch operand']
  %s0 = inlined_call_operand.vmem [shape: f32[1,128], index: 0, kind: input, shape index: {}]
  %s1 = inlined_call_operand.vmem [shape: f32[128,1], index: 1, kind: input, shape index: {}]
  %s2 = inlined_call_operand.vmem [shape: bf16[128,128], index: 2, kind: input, shape index: {}]
  %s3 = inlined_call_operand.vmem [shape: bf16[128,128], index: 3, kind: input, shape index: {}]
  %s4 = inlined_call_operand.hbm [shape: f32[1,128], index: 4, kind: output, shape index: {}]
  %s5 = sld [smem:[#allocation0]]
  $region34: #{tpu_custom_call.1} parent=0
    _
  %s7 = ssub.s32 1, %s5
  %s8 = scalar_select 0, %s7, %s5
  $region1: #{tpu_custom_call.1} parent=0
    #allocation6 [shape = 'u8[512]{0}', space=vmem, size = 0x400, scoped, tag = 'output window, operand 0, single buffered']
    #allocation7 [shape = 's32[1]{0}', space=sflag, size = 0x4, scoped, tag = 'scoped memory for tpu_custom_call.1']
    %9 = vsyncpa [#allocation7], 0
    // Predicated region
    $region2: #{tpu_custom_call.1} parent=1 // pred_check
      _
    $region3: #{tpu_custom_call.1} parent=1 // pred_check_branch
      %11 = sbr.rel (0) target = $region5
    $region4: #{tpu_custom_call.1} parent=1 // pred_region
      _
    $region5: #{tpu_custom_call.1} parent=1 // pred_fallthru
      _
    // Predicated region
    $region6: #{tpu_custom_call.1} parent=1 // pred_check
      _
    $region7: #{tpu_custom_call.1} parent=1 // pred_check_branch
      %13 = sbr.rel (0) target = $region9
    $region8: #{tpu_custom_call.1} parent=1 // pred_region
      _
    $region9: #{tpu_custom_call.1} parent=1 // pred_fallthru
      _
    // Predicated region
    $region10: #{tpu_custom_call.1} parent=1 // pred_check
      _
    $region11: #{tpu_custom_call.1} parent=1 // pred_check_branch
      %15 = sbr.rel (0) target = $region13
    $region12: #{tpu_custom_call.1} parent=1 // pred_region
      _
    $region13: #{tpu_custom_call.1} parent=1 // pred_fallthru
      _
    // Predicated region
    $region14: #{tpu_custom_call.1} parent=1 // pred_check
      _
    $region15: #{tpu_custom_call.1} parent=1 // pred_check_branch
      %17 = sbr.rel (0) target = $region17
    $region16: #{tpu_custom_call.1} parent=1 // pred_region
      _
    $region17: #{tpu_custom_call.1} parent=1 // pred_fallthru
      _
    %s19 = smul.u32 0, 128
    %p20 = scmp.eq.s32.totalorder 0, 0
    // Predicated region
    $region18: #{tpu_custom_call.1} parent=1 // pred_check
      %p21 = pneg %p20
    $region19: #{tpu_custom_call.1} parent=1 // pred_check_branch
      %23 = sbr.rel (%p21) target = $region21
    $region20: #{tpu_custom_call.1} parent=1 // pred_region
      %24 = vst [vmem:[#allocation2] sm:$0x1] -inf
      %25 = vst [vmem:[#allocation3] sm:$0x1] 0.0
      %26 = vst [vmem:[#allocation4] sm:$0x1] 0.0
      %27 = vst [vmem:[#allocation5] sm:$0x1] 0.0
    $region21: #{tpu_custom_call.1} parent=1 // pred_fallthru
      _
    %s28 = sshra.s32 %s19, 3
    %s29 = sand.u32 %s19, 7
    %s30 = smul.addr %s28, 4
    %s31 = scalar_lea.vmem %s3, %s30
    %v32 = vld [vmem:[%s31] sm:$0xf]
    %v33 = vld [vmem:[%s31 + $0x4] sm:$0xf]
    %v34 = vld [vmem:[%s31 + $0x8] sm:$0xf]
    %v35 = vld [vmem:[%s31 + $0xc] sm:$0xf]
    %v36 = vld [vmem:[%s31 + $0x10] sm:$0xf]
    %v37 = vld [vmem:[%s31 + $0x14] sm:$0xf]
    %v38 = vld [vmem:[%s31 + $0x18] sm:$0xf]
    %v39 = vld [vmem:[%s31 + $0x1c] sm:$0xf]
    %v40 = vld [vmem:[%s31 + $0x20] sm:$0xf]
    %v41 = vld [vmem:[%s31 + $0x24] sm:$0xf]
    %v42 = vld [vmem:[%s31 + $0x28] sm:$0xf]
    %v43 = vld [vmem:[%s31 + $0x2c] sm:$0xf]
    %v44 = vld [vmem:[%s31 + $0x30] sm:$0xf]
    %v45 = vld [vmem:[%s31 + $0x34] sm:$0xf]
    %v46 = vld [vmem:[%s31 + $0x38] sm:$0xf]
    %v47 = vld [vmem:[%s31 + $0x3c] sm:$0xf]
    %s48 = scalar_lea.vmem %s1, %s19
    %v49 = vld [vmem:[%s48] sm:$0xff]
    %v50 = vld [vmem:[%s48 + $0x8] sm:$0xff]
    %v51 = vld [vmem:[%s48 + $0x10] sm:$0xff]
    %v52 = vld [vmem:[%s48 + $0x18] sm:$0xff]
    %v53 = vld [vmem:[%s48 + $0x20] sm:$0xff]
    %v54 = vld [vmem:[%s48 + $0x28] sm:$0xff]
    %v55 = vld [vmem:[%s48 + $0x30] sm:$0xff]
    %v56 = vld [vmem:[%s48 + $0x38] sm:$0xff]
    %v57 = vld [vmem:[%s48 + $0x40] sm:$0xff]
    %v58 = vld [vmem:[%s48 + $0x48] sm:$0xff]
    %v59 = vld [vmem:[%s48 + $0x50] sm:$0xff]
    %v60 = vld [vmem:[%s48 + $0x58] sm:$0xff]
    %v61 = vld [vmem:[%s48 + $0x60] sm:$0xff]
    %v62 = vld [vmem:[%s48 + $0x68] sm:$0xff]
    %v63 = vld [vmem:[%s48 + $0x70] sm:$0xff]
    %v64 = vld [vmem:[%s48 + $0x78] sm:$0xff]
    %v65 = vld [vmem:[%s2] sm:$0xf]
    %v66 = vld [vmem:[%s2 + $0x4] sm:$0xf]
    %v67 = vld [vmem:[%s2 + $0x8] sm:$0xf]
    %v68 = vld [vmem:[%s2 + $0xc] sm:$0xf]
    %v69 = vld [vmem:[%s2 + $0x10] sm:$0xf]
    %v70 = vld [vmem:[%s2 + $0x14] sm:$0xf]
    %v71 = vld [vmem:[%s2 + $0x18] sm:$0xf]
    %v72 = vld [vmem:[%s2 + $0x1c] sm:$0xf]
    %v73 = vld [vmem:[%s2 + $0x20] sm:$0xf]
    %v74 = vld [vmem:[%s2 + $0x24] sm:$0xf]
    %v75 = vld [vmem:[%s2 + $0x28] sm:$0xf]
    %v76 = vld [vmem:[%s2 + $0x2c] sm:$0xf]
    %v77 = vld [vmem:[%s2 + $0x30] sm:$0xf]
    %v78 = vld [vmem:[%s2 + $0x34] sm:$0xf]
    %v79 = vld [vmem:[%s2 + $0x38] sm:$0xf]
    %v80 = vld [vmem:[%s2 + $0x3c] sm:$0xf]
    %v97 = vunpack.c.l.b16 %v32
    %v98 = vunpack.c.l.b16 %v33
    %v99 = vunpack.c.l.b16 %v34
    %v100 = vunpack.c.l.b16 %v35
    %v101 = vunpack.c.l.b16 %v36
    %v102 = vunpack.c.l.b16 %v37
    %v103 = vunpack.c.l.b16 %v38
    %v104 = vunpack.c.l.b16 %v39
    %v105 = vunpack.c.l.b16 %v40
    %v106 = vunpack.c.l.b16 %v41
    %v107 = vunpack.c.l.b16 %v42
    %v108 = vunpack.c.l.b16 %v43
    %v109 = vunpack.c.l.b16 %v44
    %v110 = vunpack.c.l.b16 %v45
    %v111 = vunpack.c.l.b16 %v46
    %v112 = vunpack.c.l.b16 %v47
    %v113 = vpack.c.b16 %v98, %v97
    %v114 = vpack.c.b16 %v100, %v99
    %v115 = vpack.c.b16 %v102, %v101
    %v116 = vpack.c.b16 %v104, %v103
    %v117 = vpack.c.b16 %v106, %v105
    %v118 = vpack.c.b16 %v108, %v107
    %v119 = vpack.c.b16 %v110, %v109
    %v120 = vpack.c.b16 %v112, %v111
    %v145 = vunpack.c.l.b16 %v65
    %v146 = vunpack.c.l.b16 %v66
    %v147 = vunpack.c.l.b16 %v67
    %v148 = vunpack.c.l.b16 %v68
    %v149 = vunpack.c.l.b16 %v69
    %v150 = vunpack.c.l.b16 %v70
    %v151 = vunpack.c.l.b16 %v71
    %v152 = vunpack.c.l.b16 %v72
    %v153 = vunpack.c.l.b16 %v73
    %v154 = vunpack.c.l.b16 %v74
    %v155 = vunpack.c.l.b16 %v75
    %v156 = vunpack.c.l.b16 %v76
    %v157 = vunpack.c.l.b16 %v77
    %v158 = vunpack.c.l.b16 %v78
    %v159 = vunpack.c.l.b16 %v79
    %v160 = vunpack.c.l.b16 %v80
    %v161 = vpack.c.b16 %v146, %v145
    %v162 = vpack.c.b16 %v148, %v147
    %v163 = vpack.c.b16 %v150, %v149
    %v164 = vpack.c.b16 %v152, %v151
    %v165 = vpack.c.b16 %v154, %v153
    %v166 = vpack.c.b16 %v156, %v155
    %v167 = vpack.c.b16 %v158, %v157
    %v168 = vpack.c.b16 %v160, %v159
    %177 = vmatprep.subr.bf16.mxu0 0
    %178 = vmatpush1.bf16.xpose.msra.mxu0 %v161
    %179 = vmatprep.subr.bf16.mxu0 0
    %180 = vmatpush1.bf16.xpose.msra.mxu0 %v162
    %181 = vmatprep.subr.bf16.mxu0 0
    %182 = vmatpush1.bf16.xpose.msra.mxu0 %v163
    %183 = vmatprep.subr.bf16.mxu0 0
    %184 = vmatpush1.bf16.xpose.msra.mxu0 %v164
    %185 = vmatprep.subr.bf16.mxu0 0
    %186 = vmatpush1.bf16.xpose.msra.mxu0 %v165
    %187 = vmatprep.subr.bf16.mxu0 0
    %188 = vmatpush1.bf16.xpose.msra.mxu0 %v166
    %189 = vmatprep.subr.bf16.mxu0 0
    %190 = vmatpush1.bf16.xpose.msra.mxu0 %v167
    %191 = vmatprep.subr.bf16.mxu0 0
    %192 = vmatpush1.bf16.xpose.msra.mxu0 %v168
    %193 = vmatprep.subr.bf16.mxu0 0
    %194 = vmatpush1.bf16.xpose.msra.mxu0 0
    %195 = vmatprep.subr.bf16.mxu0 0
    %196 = vmatpush1.bf16.xpose.msra.mxu0 0
    %197 = vmatprep.subr.bf16.mxu0 0
    %198 = vmatpush1.bf16.xpose.msra.mxu0 0
    %199 = vmatprep.subr.bf16.mxu0 0
    %200 = vmatpush1.bf16.xpose.msra.mxu0 0
    %201 = vmatprep.subr.bf16.mxu0 0
    %202 = vmatpush1.bf16.xpose.msra.mxu0 0
    %203 = vmatprep.subr.bf16.mxu0 0
    %204 = vmatpush1.bf16.xpose.msra.mxu0 0
    %205 = vmatprep.subr.bf16.mxu0 0
    %206 = vmatpush1.bf16.xpose.msra.mxu0 0
    %207 = vmatprep.subr.bf16.mxu0 0
    %208 = vmatpush1.bf16.xpose.msra.mxu0 0
    %209 = vmatprep.mubr.bf16.mxu0 0
    %210 = vmatmul.mubr.bf16.gmra.mrb[0].mxu0 %v113
    %v211 = vpop.f32.mrb[0].mxu0
    %v212 = vadd.f32 0.0, %v211
    %v213 = vpop.f32.mrb[0].mxu0
    %v214 = vpop.f32.mrb[0].mxu0
    %v215 = vadd.f32 0.0, %v214
    %v216 = vpop.f32.mrb[0].mxu0
    %217 = vmatprep.mubr.bf16.mxu0 0
    %218 = vmatmul.mubr.bf16.gmra.mrb[0].mxu0 %v114
    %v219 = vpop.f32.mrb[0].mxu0
    %v220 = vadd.f32 0.0, %v219
    %v221 = vpop.f32.mrb[0].mxu0
    %v222 = vpop.f32.mrb[0].mxu0
    %v223 = vadd.f32 0.0, %v222
    %v224 = vpop.f32.mrb[0].mxu0
    %225 = vmatprep.mubr.bf16.mxu0 0
    %226 = vmatmul.mubr.bf16.gmra.mrb[0].mxu0 %v115
    %v227 = vpop.f32.mrb[0].mxu0
    %v228 = vadd.f32 0.0, %v227
    %v229 = vpop.f32.mrb[0].mxu0
    %v230 = vpop.f32.mrb[0].mxu0
    %v231 = vadd.f32 0.0, %v230
    %v232 = vpop.f32.mrb[0].mxu0
    %233 = vmatprep.mubr.bf16.mxu0 0
    %234 = vmatmul.mubr.bf16.gmra.mrb[0].mxu0 %v116
    %v235 = vpop.f32.mrb[0].mxu0
    %v236 = vadd.f32 0.0, %v235
    %v237 = vpop.f32.mrb[0].mxu0
    %v238 = vpop.f32.mrb[0].mxu0
    %v239 = vadd.f32 0.0, %v238
    %v240 = vpop.f32.mrb[0].mxu0
    %241 = vmatprep.mubr.bf16.mxu0 0
    %242 = vmatmul.mubr.bf16.gmra.mrb[0].mxu0 %v117
    %v243 = vpop.f32.mrb[0].mxu0
    %v244 = vadd.f32 0.0, %v243
    %v245 = vpop.f32.mrb[0].mxu0
    %v246 = vpop.f32.mrb[0].mxu0
    %v247 = vadd.f32 0.0, %v246
    %v248 = vpop.f32.mrb[0].mxu0
    %249 = vmatprep.mubr.bf16.mxu0 0
    %250 = vmatmul.mubr.bf16.gmra.mrb[0].mxu0 %v118
    %v251 = vpop.f32.mrb[0].mxu0
    %v252 = vadd.f32 0.0, %v251
    %v253 = vpop.f32.mrb[0].mxu0
    %v254 = vpop.f32.mrb[0].mxu0
    %v255 = vadd.f32 0.0, %v254
    %v256 = vpop.f32.mrb[0].mxu0
    %257 = vmatprep.mubr.bf16.mxu0 0
    %258 = vmatmul.mubr.bf16.gmra.mrb[0].mxu0 %v119
    %v259 = vpop.f32.mrb[0].mxu0
    %v260 = vadd.f32 0.0, %v259
    %v261 = vpop.f32.mrb[0].mxu0
    %v262 = vpop.f32.mrb[0].mxu0
    %v263 = vadd.f32 0.0, %v262
    %v264 = vpop.f32.mrb[0].mxu0
    %265 = vmatprep.mubr.bf16.mxu0 0
    %266 = vmatmul.mubr.bf16.gmra.mrb[0].mxu0 %v120
    %v267 = vpop.f32.mrb[0].mxu0
    %v268 = vadd.f32 0.0, %v267
    %v269 = vpop.f32.mrb[0].mxu0
    %v270 = vpop.f32.mrb[0].mxu0
    %v271 = vadd.f32 0.0, %v270
    %v272 = vpop.f32.mrb[0].mxu0
    %273 = vdwg.mxu0
    %v274 = vlaneseq
    %v275 = vshrl.u32 %v274, 7
    %v276 = vadd.s32 %v275, 8
    %v277 = vadd.s32 %v275, 16
    %v278 = vadd.s32 %v275, 24
    %v279 = vadd.s32 %v275, 32
    %v280 = vadd.s32 %v275, 40
    %v281 = vadd.s32 %v275, 48
    %v282 = vadd.s32 %v275, 56
    %v283 = vadd.s32 %v275, 64
    %v284 = vadd.s32 %v275, 72
    %v285 = vadd.s32 %v275, 80
    %v286 = vadd.s32 %v275, 88
    %v287 = vadd.s32 %v275, 96
    %v288 = vadd.s32 %v275, 104
    %v289 = vadd.s32 %v275, 112
    %v290 = vadd.s32 %v275, 120
    %v291 = vstv %s19
    %v292 = vadd.s32 %v291, %v275
    %v293 = vadd.s32 %v291, %v276
    %v294 = vadd.s32 %v291, %v277
    %v295 = vadd.s32 %v291, %v278
    %v296 = vadd.s32 %v291, %v279
    %v297 = vadd.s32 %v291, %v280
    %v298 = vadd.s32 %v291, %v281
    %v299 = vadd.s32 %v291, %v282
    %v300 = vadd.s32 %v291, %v283
    %v301 = vadd.s32 %v291, %v284
    %v302 = vadd.s32 %v291, %v285
    %v303 = vadd.s32 %v291, %v286
    %v304 = vadd.s32 %v291, %v287
    %v305 = vadd.s32 %v291, %v288
    %v306 = vadd.s32 %v291, %v289
    %v307 = vadd.s32 %v291, %v290
    %s308 = smul.u32 0, 128
    %v309 = vlaneseq
    %v310 = vand.u32 %v309, 127
    %v311 = vstv %s308
    %v312 = vadd.s32 %v311, %v310
    %vm313 = vcmp.lt.s32.totalorder %v292, 16
    %vm314 = vcmp.lt.s32.totalorder %v293, 16
    %vm315 = vcmp.lt.s32.totalorder %v294, 16
    %vm316 = vcmp.lt.s32.totalorder %v295, 16
    %vm317 = vcmp.lt.s32.totalorder %v296, 16
    %vm318 = vcmp.lt.s32.totalorder %v297, 16
    %vm319 = vcmp.lt.s32.totalorder %v298, 16
    %vm320 = vcmp.lt.s32.totalorder %v299, 16
    %vm321 = vcmp.lt.s32.totalorder %v300, 16
    %vm322 = vcmp.lt.s32.totalorder %v301, 16
    %vm323 = vcmp.lt.s32.totalorder %v302, 16
    %vm324 = vcmp.lt.s32.totalorder %v303, 16
    %vm325 = vcmp.lt.s32.totalorder %v304, 16
    %vm326 = vcmp.lt.s32.totalorder %v305, 16
    %vm327 = vcmp.lt.s32.totalorder %v306, 16
    %vm328 = vcmp.lt.s32.totalorder %v307, 16
    %vm329 = vcmp.ne.s32.totalorder %v292, %v312
    %vm330 = vcmp.ne.s32.totalorder %v293, %v312
    %vm331 = vcmp.ne.s32.totalorder %v294, %v312
    %vm332 = vcmp.ne.s32.totalorder %v295, %v312
    %vm333 = vcmp.ne.s32.totalorder %v296, %v312
    %vm334 = vcmp.ne.s32.totalorder %v297, %v312
    %vm335 = vcmp.ne.s32.totalorder %v298, %v312
    %vm336 = vcmp.ne.s32.totalorder %v299, %v312
    %vm337 = vcmp.ne.s32.totalorder %v300, %v312
    %vm338 = vcmp.ne.s32.totalorder %v301, %v312
    %vm339 = vcmp.ne.s32.totalorder %v302, %v312
    %vm340 = vcmp.ne.s32.totalorder %v303, %v312
    %vm341 = vcmp.ne.s32.totalorder %v304, %v312
    %vm342 = vcmp.ne.s32.totalorder %v305, %v312
    %vm343 = vcmp.ne.s32.totalorder %v306, %v312
    %vm344 = vcmp.ne.s32.totalorder %v307, %v312
    %v345 = vsel %vm313, 1, 0
    %v346 = vsel %vm314, 1, 0
    %v347 = vsel %vm315, 1, 0
    %v348 = vsel %vm316, 1, 0
    %v349 = vsel %vm317, 1, 0
    %v350 = vsel %vm318, 1, 0
    %v351 = vsel %vm319, 1, 0
    %v352 = vsel %vm320, 1, 0
    %v353 = vsel %vm321, 1, 0
    %v354 = vsel %vm322, 1, 0
    %v355 = vsel %vm323, 1, 0
    %v356 = vsel %vm324, 1, 0
    %v357 = vsel %vm325, 1, 0
    %v358 = vsel %vm326, 1, 0
    %v359 = vsel %vm327, 1, 0
    %v360 = vsel %vm328, 1, 0
    %vm361 = vcmp.eq.s32.totalorder %v345, 1
    %vm362 = vcmp.eq.s32.totalorder %v346, 1
    %vm363 = vcmp.eq.s32.totalorder %v347, 1
    %vm364 = vcmp.eq.s32.totalorder %v348, 1
    %vm365 = vcmp.eq.s32.totalorder %v349, 1
    %vm366 = vcmp.eq.s32.totalorder %v350, 1
    %vm367 = vcmp.eq.s32.totalorder %v351, 1
    %vm368 = vcmp.eq.s32.totalorder %v352, 1
    %vm369 = vcmp.eq.s32.totalorder %v353, 1
    %vm370 = vcmp.eq.s32.totalorder %v354, 1
    %vm371 = vcmp.eq.s32.totalorder %v355, 1
    %vm372 = vcmp.eq.s32.totalorder %v356, 1
    %vm373 = vcmp.eq.s32.totalorder %v357, 1
    %vm374 = vcmp.eq.s32.totalorder %v358, 1
    %vm375 = vcmp.eq.s32.totalorder %v359, 1
    %vm376 = vcmp.eq.s32.totalorder %v360, 1
    %vm377 = vmand %vm361, %vm329
    %vm378 = vmand %vm362, %vm330
    %vm379 = vmand %vm363, %vm331
    %vm380 = vmand %vm364, %vm332
    %vm381 = vmand %vm365, %vm333
    %vm382 = vmand %vm366, %vm334
    %vm383 = vmand %vm367, %vm335
    %vm384 = vmand %vm368, %vm336
    %vm385 = vmand %vm369, %vm337
    %vm386 = vmand %vm370, %vm338
    %vm387 = vmand %vm371, %vm339
    %vm388 = vmand %vm372, %vm340
    %vm389 = vmand %vm373, %vm341
    %vm390 = vmand %vm374, %vm342
    %vm391 = vmand %vm375, %vm343
    %vm392 = vmand %vm376, %vm344
    %v393 = vld [vmem:[#allocation2] sm:$0x1]
    %v394 = vsel %vm361, %v212, -inf
    %v395 = vsel %vm362, %v215, -inf
    %v396 = vsel %vm363, %v220, -inf
    %v397 = vsel %vm364, %v223, -inf
    %v398 = vsel %vm365, %v228, -inf
    %v399 = vsel %vm366, %v231, -inf
    %v400 = vsel %vm367, %v236, -inf
    %v401 = vsel %vm368, %v239, -inf
    %v402 = vsel %vm369, %v244, -inf
    %v403 = vsel %vm370, %v247, -inf
    %v404 = vsel %vm371, %v252, -inf
    %v405 = vsel %vm372, %v255, -inf
    %v406 = vsel %vm373, %v260, -inf
    %v407 = vsel %vm374, %v263, -inf
    %v408 = vsel %vm375, %v268, -inf
    %v409 = vsel %vm376, %v271, -inf
    %v410 = vmax.f32 %v394, %v398
    %v411 = vmax.f32 %v395, %v399
    %v412 = vmax.f32 %v396, %v400
    %v413 = vmax.f32 %v397, %v401
    %v414 = vmax.f32 %v410, %v402
    %v415 = vmax.f32 %v411, %v403
    %v416 = vmax.f32 %v412, %v404
    %v417 = vmax.f32 %v413, %v405
    %v418 = vmax.f32 %v414, %v406
    %v419 = vmax.f32 %v415, %v407
    %v420 = vmax.f32 %v416, %v408
    %v421 = vmax.f32 %v417, %v409
    %v422 = vmax.f32 %v418, %v419
    %v423 = vmax.f32 %v420, %v421
    %v424 = vmax.f32 %v422, %v423
    %v425 = vrot.slane %v424, 4
    %v426 = vmax.f32 %v424, %v425
    %v427 = vrot.slane %v426, 2
    %v428 = vmax.f32 %v426, %v427
    %v429 = vrot.slane %v428, 1
    %v430 = vmax.f32 %v428, %v429
    %v431 = vmax.f32 %v393, %v430
    %v432 = vsub.f32 %v393, %v431
    %v433 = vmul.f32 %v432, 1.442695
    %v434 = vpow.pop %v433
    %v435 = vld [vmem:[%s0] sm:$0x1]
    %v437 = vlaneseq
    %v438 = vshrl.u32 %v437, 7
    %v439 = vsub.s32 0, %v438
    %v440 = vrot.slane %v435, %v439
    %443 = vset.pattern.permute.xlu0 0
    %444 = vperm.xlu0 %443, %v49
    %v445 = vpop.permute.xlu0 %444
    %448 = vset.pattern.permute.xlu0 0
    %449 = vperm.xlu0 %448, %v50
    %v450 = vpop.permute.xlu0 %449
    %453 = vset.pattern.permute.xlu0 0
    %454 = vperm.xlu0 %453, %v51
    %v455 = vpop.permute.xlu0 %454
    %458 = vset.pattern.permute.xlu0 0
    %459 = vperm.xlu0 %458, %v52
    %v460 = vpop.permute.xlu0 %459
    %463 = vset.pattern.permute.xlu0 0
    %464 = vperm.xlu0 %463, %v53
    %v465 = vpop.permute.xlu0 %464
    %468 = vset.pattern.permute.xlu0 0
    %469 = vperm.xlu0 %468, %v54
    %v470 = vpop.permute.xlu0 %469
    %473 = vset.pattern.permute.xlu0 0
    %474 = vperm.xlu0 %473, %v55
    %v475 = vpop.permute.xlu0 %474
    %478 = vset.pattern.permute.xlu0 0
    %479 = vperm.xlu0 %478, %v56
    %v480 = vpop.permute.xlu0 %479
    %483 = vset.pattern.permute.xlu0 0
    %484 = vperm.xlu0 %483, %v57
    %v485 = vpop.permute.xlu0 %484
    %488 = vset.pattern.permute.xlu0 0
    %489 = vperm.xlu0 %488, %v58
    %v490 = vpop.permute.xlu0 %489
    %493 = vset.pattern.permute.xlu0 0
    %494 = vperm.xlu0 %493, %v59
    %v495 = vpop.permute.xlu0 %494
    %498 = vset.pattern.permute.xlu0 0
    %499 = vperm.xlu0 %498, %v60
    %v500 = vpop.permute.xlu0 %499
    %503 = vset.pattern.permute.xlu0 0
    %504 = vperm.xlu0 %503, %v61
    %v505 = vpop.permute.xlu0 %504
    %508 = vset.pattern.permute.xlu0 0
    %509 = vperm.xlu0 %508, %v62
    %v510 = vpop.permute.xlu0 %509
    %513 = vset.pattern.permute.xlu0 0
    %514 = vperm.xlu0 %513, %v63
    %v515 = vpop.permute.xlu0 %514
    %518 = vset.pattern.permute.xlu0 0
    %519 = vperm.xlu0 %518, %v64
    %v520 = vpop.permute.xlu0 %519
    %vm522 = vcmp.eq.f32.partialorder %v440, %v445
    %vm523 = vcmp.eq.f32.partialorder %v440, %v450
    %vm524 = vcmp.eq.f32.partialorder %v440, %v455
    %vm525 = vcmp.eq.f32.partialorder %v440, %v460
    %vm526 = vcmp.eq.f32.partialorder %v440, %v465
    %vm527 = vcmp.eq.f32.partialorder %v440, %v470
    %vm528 = vcmp.eq.f32.partialorder %v440, %v475
    %vm529 = vcmp.eq.f32.partialorder %v440, %v480
    %vm530 = vcmp.eq.f32.partialorder %v440, %v485
    %vm531 = vcmp.eq.f32.partialorder %v440, %v490
    %vm532 = vcmp.eq.f32.partialorder %v440, %v495
    %vm533 = vcmp.eq.f32.partialorder %v440, %v500
    %vm534 = vcmp.eq.f32.partialorder %v440, %v505
    %vm535 = vcmp.eq.f32.partialorder %v440, %v510
    %vm536 = vcmp.eq.f32.partialorder %v440, %v515
    %vm537 = vcmp.eq.f32.partialorder %v440, %v520
    %v538 = vsel %vm522, 1, 0
    %v539 = vsel %vm523, 1, 0
    %v540 = vsel %vm524, 1, 0
    %v541 = vsel %vm525, 1, 0
    %v542 = vsel %vm526, 1, 0
    %v543 = vsel %vm527, 1, 0
    %v544 = vsel %vm528, 1, 0
    %v545 = vsel %vm529, 1, 0
    %v546 = vsel %vm530, 1, 0
    %v547 = vsel %vm531, 1, 0
    %v548 = vsel %vm532, 1, 0
    %v549 = vsel %vm533, 1, 0
    %v550 = vsel %vm534, 1, 0
    %v551 = vsel %vm535, 1, 0
    %v552 = vsel %vm536, 1, 0
    %v553 = vsel %vm537, 1, 0
    %v554 = vcvt.s32.f32 %v538
    %v555 = vcvt.s32.f32 %v539
    %v556 = vcvt.s32.f32 %v540
    %v557 = vcvt.s32.f32 %v541
    %v558 = vcvt.s32.f32 %v542
    %v559 = vcvt.s32.f32 %v543
    %v560 = vcvt.s32.f32 %v544
    %v561 = vcvt.s32.f32 %v545
    %v562 = vcvt.s32.f32 %v546
    %v563 = vcvt.s32.f32 %v547
    %v564 = vcvt.s32.f32 %v548
    %v565 = vcvt.s32.f32 %v549
    %v566 = vcvt.s32.f32 %v550
    %v567 = vcvt.s32.f32 %v551
    %v568 = vcvt.s32.f32 %v552
    %v569 = vcvt.s32.f32 %v553
    %v570 = vsel %vm377, %v554, 0.0
    %v571 = vsel %vm378, %v555, 0.0
    %v572 = vsel %vm379, %v556, 0.0
    %v573 = vsel %vm380, %v557, 0.0
    %v574 = vsel %vm381, %v558, 0.0
    %v575 = vsel %vm382, %v559, 0.0
    %v576 = vsel %vm383, %v560, 0.0
    %v577 = vsel %vm384, %v561, 0.0
    %v578 = vsel %vm385, %v562, 0.0
    %v579 = vsel %vm386, %v563, 0.0
    %v580 = vsel %vm387, %v564, 0.0
    %v581 = vsel %vm388, %v565, 0.0
    %v582 = vsel %vm389, %v566, 0.0
    %v583 = vsel %vm390, %v567, 0.0
    %v584 = vsel %vm391, %v568, 0.0
    %v585 = vsel %vm392, %v569, 0.0
    %v587 = vlaneseq
    %v588 = vshrl.u32 %v587, 7
    %v589 = vsub.s32 0, %v588
    %v590 = vrot.slane %v431, %v589
    %v592 = vsub.f32 %v212, %v590
    %v593 = vsub.f32 %v215, %v590
    %v594 = vsub.f32 %v220, %v590
    %v595 = vsub.f32 %v223, %v590
    %v596 = vsub.f32 %v228, %v590
    %v597 = vsub.f32 %v231, %v590
    %v598 = vsub.f32 %v236, %v590
    %v599 = vsub.f32 %v239, %v590
    %v600 = vsub.f32 %v244, %v590
    %v601 = vsub.f32 %v247, %v590
    %v602 = vsub.f32 %v252, %v590
    %v603 = vsub.f32 %v255, %v590
    %v604 = vsub.f32 %v260, %v590
    %v605 = vsub.f32 %v263, %v590
    %v606 = vsub.f32 %v268, %v590
    %v607 = vsub.f32 %v271, %v590
    %v608 = vmul.f32 %v592, 1.442695
    %v609 = vpow.pop %v608
    %v610 = vmul.f32 %v593, 1.442695
    %v611 = vpow.pop %v610
    %v612 = vmul.f32 %v594, 1.442695
    %v613 = vpow.pop %v612
    %v614 = vmul.f32 %v595, 1.442695
    %v615 = vpow.pop %v614
    %v616 = vmul.f32 %v596, 1.442695
    %v617 = vpow.pop %v616
    %v618 = vmul.f32 %v597, 1.442695
    %v619 = vpow.pop %v618
    %v620 = vmul.f32 %v598, 1.442695
    %v621 = vpow.pop %v620
    %v622 = vmul.f32 %v599, 1.442695
    %v623 = vpow.pop %v622
    %v624 = vmul.f32 %v600, 1.442695
    %v625 = vpow.pop %v624
    %v626 = vmul.f32 %v601, 1.442695
    %v627 = vpow.pop %v626
    %v628 = vmul.f32 %v602, 1.442695
    %v629 = vpow.pop %v628
    %v630 = vmul.f32 %v603, 1.442695
    %v631 = vpow.pop %v630
    %v632 = vmul.f32 %v604, 1.442695
    %v633 = vpow.pop %v632
    %v634 = vmul.f32 %v605, 1.442695
    %v635 = vpow.pop %v634
    %v636 = vmul.f32 %v606, 1.442695
    %v637 = vpow.pop %v636
    %v638 = vmul.f32 %v607, 1.442695
    %v639 = vpow.pop %v638
    %v640 = vsel %vm377, %v609, 0.0
    %v641 = vsel %vm378, %v611, 0.0
    %v642 = vsel %vm379, %v613, 0.0
    %v643 = vsel %vm380, %v615, 0.0
    %v644 = vsel %vm381, %v617, 0.0
    %v645 = vsel %vm382, %v619, 0.0
    %v646 = vsel %vm383, %v621, 0.0
    %v647 = vsel %vm384, %v623, 0.0
    %v648 = vsel %vm385, %v625, 0.0
    %v649 = vsel %vm386, %v627, 0.0
    %v650 = vsel %vm387, %v629, 0.0
    %v651 = vsel %vm388, %v631, 0.0
    %v652 = vsel %vm389, %v633, 0.0
    %v653 = vsel %vm390, %v635, 0.0
    %v654 = vsel %vm391, %v637, 0.0
    %v655 = vsel %vm392, %v639, 0.0
    %v656 = vld [vmem:[#allocation3] sm:$0x1]
    %v657 = vmul.f32 %v434, %v656
    %v658 = vadd.f32 %v640, %v641
    %v659 = vadd.f32 %v658, %v642
    %v660 = vadd.f32 %v659, %v643
    %v661 = vadd.f32 %v660, %v644
    %v662 = vadd.f32 %v661, %v645
    %v663 = vadd.f32 %v662, %v646
    %v664 = vadd.f32 %v663, %v647
    %v665 = vadd.f32 %v664, %v648
    %v666 = vadd.f32 %v665, %v649
    %v667 = vadd.f32 %v666, %v650
    %v668 = vadd.f32 %v667, %v651
    %v669 = vadd.f32 %v668, %v652
    %v670 = vadd.f32 %v669, %v653
    %v671 = vadd.f32 %v670, %v654
    %v672 = vadd.f32 %v671, %v655
    %v673 = vrot.slane %v672, 4
    %v674 = vadd.f32 %v672, %v673
    %v675 = vrot.slane %v674, 2
    %v676 = vadd.f32 %v674, %v675
    %v677 = vrot.slane %v676, 1
    %v678 = vadd.f32 %v676, %v677
    %v679 = vadd.f32 %v657, %v678
    %680 = vst [vmem:[#allocation3] sm:$0x1] %v679
    %v681 = vld [vmem:[#allocation4] sm:$0x1]
    %v682 = vmul.f32 %v570, %v212
    %v683 = vmul.f32 %v571, %v215
    %v684 = vmul.f32 %v572, %v220
    %v685 = vmul.f32 %v573, %v223
    %v686 = vmul.f32 %v574, %v228
    %v687 = vmul.f32 %v575, %v231
    %v688 = vmul.f32 %v576, %v236
    %v689 = vmul.f32 %v577, %v239
    %v690 = vmul.f32 %v578, %v244
    %v691 = vmul.f32 %v579, %v247
    %v692 = vmul.f32 %v580, %v252
    %v693 = vmul.f32 %v581, %v255
    %v694 = vmul.f32 %v582, %v260
    %v695 = vmul.f32 %v583, %v263
    %v696 = vmul.f32 %v584, %v268
    %v697 = vmul.f32 %v585, %v271
    %v698 = vadd.f32 %v682, %v683
    %v699 = vadd.f32 %v698, %v684
    %v700 = vadd.f32 %v699, %v685
    %v701 = vadd.f32 %v700, %v686
    %v702 = vadd.f32 %v701, %v687
    %v703 = vadd.f32 %v702, %v688
    %v704 = vadd.f32 %v703, %v689
    %v705 = vadd.f32 %v704, %v690
    %v706 = vadd.f32 %v705, %v691
    %v707 = vadd.f32 %v706, %v692
    %v708 = vadd.f32 %v707, %v693
    %v709 = vadd.f32 %v708, %v694
    %v710 = vadd.f32 %v709, %v695
    %v711 = vadd.f32 %v710, %v696
    %v712 = vadd.f32 %v711, %v697
    %v713 = vrot.slane %v712, 4
    %v714 = vadd.f32 %v712, %v713
    %v715 = vrot.slane %v714, 2
    %v716 = vadd.f32 %v714, %v715
    %v717 = vrot.slane %v716, 1
    %v718 = vadd.f32 %v716, %v717
    %v719 = vadd.f32 %v681, %v718
    %720 = vst [vmem:[#allocation4] sm:$0x1] %v719
    %v721 = vld [vmem:[#allocation5] sm:$0x1]
    %v722 = vadd.f32 %v570, %v571
    %v723 = vadd.f32 %v722, %v572
    %v724 = vadd.f32 %v723, %v573
    %v725 = vadd.f32 %v724, %v574
    %v726 = vadd.f32 %v725, %v575
    %v727 = vadd.f32 %v726, %v576
    %v728 = vadd.f32 %v727, %v577
    %v729 = vadd.f32 %v728, %v578
    %v730 = vadd.f32 %v729, %v579
    %v731 = vadd.f32 %v730, %v580
    %v732 = vadd.f32 %v731, %v581
    %v733 = vadd.f32 %v732, %v582
    %v734 = vadd.f32 %v733, %v583
    %v735 = vadd.f32 %v734, %v584
    %v736 = vadd.f32 %v735, %v585
    %v737 = vrot.slane %v736, 4
    %v738 = vadd.f32 %v736, %v737
    %v739 = vrot.slane %v738, 2
    %v740 = vadd.f32 %v738, %v739
    %v741 = vrot.slane %v740, 1
    %v742 = vadd.f32 %v740, %v741
    %v743 = vadd.f32 %v721, %v742
    %744 = vst [vmem:[#allocation5] sm:$0x1] %v743
    %745 = vst [vmem:[#allocation2] sm:$0x1] %v431
    // Predicated region
    $region22: #{tpu_custom_call.1} parent=1 // pred_check
      %p746 = pneg %p20
    $region23: #{tpu_custom_call.1} parent=1 // pred_check_branch
      %748 = sbr.rel (%p746) target = $region25
    $region24: #{tpu_custom_call.1} parent=1 // pred_region
      %v749 = vld [vmem:[#allocation4] sm:$0x1]
      %v750 = vld [vmem:[#allocation5] sm:$0x1]
      %v751 = vrcp.pop %v750
      %v752 = vmul.f32 %v749, %v751
      %v753 = vld [vmem:[#allocation2] sm:$0x1]
      %v754 = vsub.f32 %v752, %v753
      %v755 = vld [vmem:[#allocation3] sm:$0x1]
      %v756 = vlog2.pop %v755
      %v757 = vmul.f32 %v756, 0.6931472
      %v758 = vsub.f32 %v754, %v757
      %v759 = vmul.f32 %v758, -1.0
      %760 = vst [vmem:[#allocation6] sm:$0x1] %v759
    $region25: #{tpu_custom_call.1} parent=1 // pred_fallthru
      _
    // Predicated region
    $region26: #{tpu_custom_call.1} parent=1 // pred_check
      _
    $region27: #{tpu_custom_call.1} parent=1 // pred_check_branch
      %762 = sbr.rel (0) target = $region29
    $region28: #{tpu_custom_call.1} parent=1 // pred_region
      %s764 = ssub.s32 16, 16
      %765 = vsyncadd [#allocation7], %s764
      %s767 = sshll.u32 [#allocation6], 4
      %s768 = int_to_ptr.vmem [resolvable:$true] %s767
      %770 = dma.vmem_to_hbm [thread:$0]  %s768, 16, %s4, [#allocation7]
    $region29: #{tpu_custom_call.1} parent=1 // pred_fallthru
      _
    // Predicated region
    $region30: #{tpu_custom_call.1} parent=1 // pred_check
      _
    $region31: #{tpu_custom_call.1} parent=1 // pred_check_branch
      %772 = sbr.rel (0) target = $region33
    $region32: #{tpu_custom_call.1} parent=1 // pred_region
      %773 = dma.done [#allocation7], 16
    $region33: #{tpu_custom_call.1} parent=1 // pred_fallthru
      _
    %774 = vsyncpa [#allocation7], 1

</llo_original>
